<compile_context>
chip_gen: v5e
topology: v5e:2x2
jax: 0.10.0
libtpu: 0.0.40
codegen_flags: <defaults>
</compile_context>

<pallas_src>
import functools

import jax
import jax.numpy as jnp
from jax import lax
from jax.experimental import pallas as pl
from jax.experimental.pallas import tpu as pltpu

# ---------------------------------------------------------------------------
# Model definition / padding choices
# ---------------------------------------------------------------------------

LAYER_SIZES = [8, 1900, 2300, 2400, 1100, 440, 460, 460, 8]
# activation after each linear layer
ACTS = ["gelu"] * 7 + ["tanh"]
# Padded feature sizes (multiples of 128, picked so wide N tiles divide them).
PADDED_SIZES = [128, 1920, 2304, 2560, 1152, 512, 512, 512, 128]
# Layers 0..N_STREAMED-1 use the tiled weight-streaming kernel; the rest are
# fused into a single on-chip kernel.
N_STREAMED = 4

_INV_SQRT2 = 0.7071067811865476


def _gelu(y):
    # exact (erf-based) GELU, matching torch.nn.GELU() default
    return 0.5 * y * (1.0 + lax.erf(y * _INV_SQRT2))


def _round_up(x, m):
    return ((x + m - 1) // m) * m


def _pick_tn(Np, max_tn=1024):
    """Largest N-tile (multiple of 128) dividing Np, <= max_tn, and leaving
    >= 2 blocks whenever Np > 128 (v7x megacore / double-buffering)."""
    nb = Np // 128
    best = 128
    for d in range(1, nb + 1):
        if nb % d != 0:
            continue
        tn = d * 128
        if tn <= max_tn and (Np == 128 or Np // tn >= 2):
            best = max(best, tn)
    return best


# ---------------------------------------------------------------------------
# Pallas kernel 1: streamed wide-N linear  y = act(x @ w + b)
#   grid = (Np // tn,), full-K contraction per step, x resident in VMEM.
# ---------------------------------------------------------------------------


def _linear_act_kernel(x_ref, w_ref, b_ref, o_ref, *, act):
    y = jnp.dot(x_ref[...], w_ref[...], preferred_element_type=jnp.float32)
    y = y + b_ref[...]
    if act == "gelu":
        y = _gelu(y)
    else:
        y = jnp.tanh(y)
    o_ref[...] = y.astype(o_ref.dtype)


def linear_act(x, w, b, act, *, max_tn=1024):
    """x: [Mp, Kp] f32, w: [Kp, Np] f32, b: [1, Np] f32 -> [Mp, Np] f32."""
    Mp, Kp = x.shape
    Kw, Np = w.shape
    assert Kw == Kp and Mp % 8 == 0 and Kp % 128 == 0 and Np % 128 == 0

    tn = _pick_tn(Np, max_tn)
    kernel = functools.partial(_linear_act_kernel, act=act)

    # VMEM budget: double-buffered weight tile + resident x (x2 safety) +
    # double-buffered output tile + bias, plus headroom; stay under v7x 64 MiB.
    vmem_bytes = 4 * (2 * Kp * tn + 2 * Mp * Kp + 2 * Mp * tn + 2 * Np)
    vmem_limit = int(min(vmem_bytes + (8 << 20), 56 << 20))

    return pl.pallas_call(
        kernel,
        out_shape=jax.ShapeDtypeStruct((Mp, Np), jnp.float32),
        grid_spec=pltpu.PrefetchScalarGridSpec(
            num_scalar_prefetch=0,
            grid=(Np // tn,),
            in_specs=[
                pl.BlockSpec((Mp, Kp), lambda j: (0, 0)),  # resident activations
                pl.BlockSpec((Kp, tn), lambda j: (0, j)),  # streamed weight tile
                pl.BlockSpec((1, tn), lambda j: (0, j)),   # bias tile (once/step)
            ],
            out_specs=pl.BlockSpec((Mp, tn), lambda j: (0, j)),
        ),
        compiler_params=pltpu.CompilerParams(
            dimension_semantics=("parallel",),
            vmem_limit_bytes=vmem_limit,
        ),
    )(x, w, b)


# ---------------------------------------------------------------------------
# Pallas kernel 2: fused small tail (layers 4..7), everything VMEM-resident
# ---------------------------------------------------------------------------


def _tail_kernel(x_ref, w0, b0, w1, b1, w2, b2, w3, b3, o_ref):
    h = x_ref[...]
    layers = ((w0, b0, "gelu"), (w1, b1, "gelu"), (w2, b2, "gelu"), (w3, b3, "tanh"))
    for w_ref, b_ref, act in layers:
        h = jnp.dot(h, w_ref[...], preferred_element_type=jnp.float32) + b_ref[...]
        h = _gelu(h) if act == "gelu" else jnp.tanh(h)
    o_ref[...] = h.astype(o_ref.dtype)


def fused_tail(x, tail_params):
    """x: [Mp, Kp] f32, tail_params: 4 (w, b) pairs -> [Mp, Np_last] f32."""
    Mp, _ = x.shape
    Np_out = tail_params[-1][0].shape[1]

    args = [x]
    for w, b in tail_params:
        args.append(w)
        args.append(b)

    in_specs = [pl.BlockSpec(a.shape, lambda i: (0, 0)) for a in args]

    vmem_bytes = 2 * 4 * (sum(int(a.size) for a in args) + Mp * Np_out)
    vmem_limit = int(min(vmem_bytes + (8 << 20), 56 << 20))

    return pl.pallas_call(
        _tail_kernel,
        out_shape=jax.ShapeDtypeStruct((Mp, Np_out), jnp.float32),
        grid_spec=pltpu.PrefetchScalarGridSpec(
            num_scalar_prefetch=0,
            grid=(1,),
            in_specs=in_specs,
            out_specs=pl.BlockSpec((Mp, Np_out), lambda i: (0, 0)),
        ),
        compiler_params=pltpu.CompilerParams(
            dimension_semantics=("arbitrary",),
            vmem_limit_bytes=vmem_limit,
        ),
    )(*args)


# ---------------------------------------------------------------------------
# Parameter setup (deterministic, PyTorch-Linear-style uniform init)
# ---------------------------------------------------------------------------


def init_params(key):
    params = []
    for fan_in, fan_out in zip(LAYER_SIZES[:-1], LAYER_SIZES[1:]):
        key, kw, kb = jax.random.split(key, 3)
        bound = 1.0 / jnp.sqrt(fan_in)
        # stored as [in, out] (transposed vs. PyTorch's [out, in])
        w = jax.random.uniform(
            kw, (fan_in, fan_out), jnp.float32, minval=-bound, maxval=bound
        )
        b = jax.random.uniform(
            kb, (fan_out,), jnp.float32, minval=-bound, maxval=bound
        )
        params.append((w, b))
    return params


def pad_params(params):
    padded = []
    for i, (w, b) in enumerate(params):
        kin, kout = w.shape
        kin_p, kout_p = PADDED_SIZES[i], PADDED_SIZES[i + 1]
        wp = jnp.zeros((kin_p, kout_p), jnp.float32).at[:kin, :kout].set(w)
        bp = jnp.zeros((1, kout_p), jnp.float32).at[0, :kout].set(b)
        padded.append((wp, bp))
    return padded


# ---------------------------------------------------------------------------
# Forward pass
# ---------------------------------------------------------------------------


def discriminator_forward(x, padded_params):
    """x: [B, 8] float32 -> [B, 8] float32."""
    B, Fin = x.shape
    Mp = _round_up(max(B, 1), 8)
    Kp0 = PADDED_SIZES[0]
    h = jnp.zeros((Mp, Kp0), jnp.float32).at[:B, :Fin].set(x)

    # big layers: stream weights through VMEM, wide-N / full-K tiles
    for i in range(N_STREAMED):
        wp, bp = padded_params[i]
        h = linear_act(h, wp, bp, ACTS[i])

    # small layers: single fused on-chip kernel
    h = fused_tail(h, padded_params[N_STREAMED:])

    return h[:B, : LAYER_SIZES[-1]]


def reference_forward(x, params):
    h = x
    for i, (w, b) in enumerate(params):
        h = h @ w + b
        if ACTS[i] == "gelu":
            h = _gelu(h)
        else:
            h = jnp.tanh(h)
    return h


if __name__ == "__main__":
    key = jax.random.PRNGKey(0)
    kx, kp = jax.random.split(key)

    batch = 2
    x = jax.random.normal(kx, (batch, 8), jnp.float32)

    params = init_params(kp)
    padded_params = pad_params(params)

    out = discriminator_forward(x, padded_params)
    out = jax.block_until_ready(out)

    ref = reference_forward(x, params)
    assert out.shape == (batch, 8)
    assert jnp.allclose(out, ref, atol=1e-4, rtol=1e-4), (
        f"max abs err {jnp.max(jnp.abs(out - ref))}"
    )

    print("KERNEL_OK")
</pallas_src>

<mosaic_0001>
module attributes {stable_mosaic.version = 11 : i64} {
  func.func @_linear_act_kernel(%arg0: i32, %arg1: memref<8x128xf32, #tpu.memory_space<vmem>>, %arg2: memref<128x640xf32, #tpu.memory_space<vmem>>, %arg3: memref<1x640xf32, #tpu.memory_space<vmem>>, %arg4: memref<8x640xf32, #tpu.memory_space<vmem>>) attributes {dimension_semantics = [#tpu.dimension_semantics<parallel>], iteration_bounds = array<i64: 3>, scalar_prefetch = 0 : i64, scratch_operands = 0 : i64, tpu.core_type = #tpu.core_type<tc>, window_params = [{pipeline_mode = #tpu.pipeline_mode<synchronous>, transform_indices = @transform_0, window_bounds = array<i64: 8, 128>}, {transform_indices = @transform_1, window_bounds = array<i64: 128, 640>}, {transform_indices = @transform_2, window_bounds = array<i64: 1, 640>}, {transform_indices = @transform_3, window_bounds = array<i64: 8, 640>}]} {
    %c0 = arith.constant 0 : index
    %c0_0 = arith.constant 0 : index
    %0 = vector.load %arg1[%c0, %c0_0] : memref<8x128xf32, #tpu.memory_space<vmem>>, vector<8x128xf32>
    %c0_1 = arith.constant 0 : index
    %c0_2 = arith.constant 0 : index
    %1 = vector.load %arg2[%c0_1, %c0_2] : memref<128x640xf32, #tpu.memory_space<vmem>>, vector<128x640xf32>
    %cst = arith.constant dense<0.000000e+00> : vector<8x640xf32>
    %2 = tpu.matmul %0, %1, %cst {dimension_numbers = #tpu.dot_dimension_numbers<[1], [0], [0], [1], [0, 0, 1, 1], [], []>} : vector<8x128xf32>, vector<128x640xf32>, vector<8x640xf32> -> vector<8x640xf32>
    %c0_3 = arith.constant 0 : index
    %c0_4 = arith.constant 0 : index
    %3 = vector.load %arg3[%c0_3, %c0_4] : memref<1x640xf32, #tpu.memory_space<vmem>>, vector<1x640xf32>
    %4 = vector.broadcast %3 : vector<1x640xf32> to vector<8x640xf32>
    %5 = arith.addf %2, %4 : vector<8x640xf32>
    %cst_5 = arith.constant 5.000000e-01 : f32
    %6 = vector.broadcast %cst_5 : f32 to vector<8x640xf32>
    %7 = arith.mulf %6, %5 : vector<8x640xf32>
    %cst_6 = arith.constant 0.707106769 : f32
    %8 = vector.broadcast %cst_6 : f32 to vector<8x640xf32>
    %9 = arith.mulf %5, %8 : vector<8x640xf32>
    %10 = math.erf %9 : vector<8x640xf32>
    %cst_7 = arith.constant 1.000000e+00 : f32
    %11 = vector.broadcast %cst_7 : f32 to vector<8x640xf32>
    %12 = arith.addf %11, %10 : vector<8x640xf32>
    %13 = arith.mulf %7, %12 : vector<8x640xf32>
    %c0_8 = arith.constant 0 : index
    %c0_9 = arith.constant 0 : index
    %14 = vector.load %arg4[%c0_8, %c0_9] : memref<8x640xf32, #tpu.memory_space<vmem>>, vector<8x640xf32>
    tpu.vector_store %arg4[%c0_8, %c0_9], %13 {strides = array<i32>} : memref<8x640xf32, #tpu.memory_space<vmem>>, vector<8x640xf32>,
    return
  }
  func.func @transform_0(%arg0: i32) -> (i32, i32) {
    %c0_i32 = arith.constant 0 : i32
    %c0_i32_0 = arith.constant 0 : i32
    %c0_i32_1 = arith.constant 0 : i32
    return %c0_i32, %c0_i32_0 : i32, i32
  }
  func.func @transform_1(%arg0: i32) -> (i32, i32) {
    %c0_i32 = arith.constant 0 : i32
    %c0_i32_0 = arith.constant 0 : i32
    return %c0_i32, %arg0 : i32, i32
  }
  func.func @transform_2(%arg0: i32) -> (i32, i32) {
    %c0_i32 = arith.constant 0 : i32
    %c0_i32_0 = arith.constant 0 : i32
    return %c0_i32, %arg0 : i32, i32
  }
  func.func @transform_3(%arg0: i32) -> (i32, i32) {
    %c0_i32 = arith.constant 0 : i32
    %c0_i32_0 = arith.constant 0 : i32
    return %c0_i32, %arg0 : i32, i32
  }
}

</mosaic_0001>

<llo_original>
// kernel: tpu_custom_call.1
$region0: #{tpu_custom_call.1}
  #allocation0 [shape = 'u32[]', space=smem, size = 0x4, offset = 0x4, fixed_abs, tag = 'smem constant byte address 0x4 - core index']
  #allocation1 [shape = 'u32[72,128]{1,0:T(1,128)}', space=vmem, size = 0x9000, scoped, tag = 'internal scratch']
  %s0 = inlined_call_operand.hbm [shape: f32[8,128], index: 0, kind: input, shape index: {}]
  %s1 = inlined_call_operand.hbm [shape: f32[128,1920], index: 1, kind: input, shape index: {}]
  %s2 = inlined_call_operand.hbm [shape: f32[1,1920], index: 2, kind: input, shape index: {}]
  %s3 = inlined_call_operand.hbm [shape: f32[8,1920], index: 3, kind: output, shape index: {}]
  %s4 = sld [smem:[#allocation0]]
  $region57: #{tpu_custom_call.1} parent=0
    _
  %s6 = ssub.s32 1, %s4
  %s7 = scalar_select 0, %s6, %s4
  $region1: #{tpu_custom_call.1} parent=0
    #allocation2 [shape = 'u8[4096]{0}', space=vmem, size = 0x1000, scoped, tag = 'input window, operand 0, single buffered']
    #allocation3 [shape = 's32[2]{0}', space=sflag, size = 0x8, scoped, tag = 'scoped memory for tpu_custom_call.1']
    #allocation4 [shape = 's32[2]{0}', space=sflag, size = 0x8, scoped, tag = 'scoped memory for tpu_custom_call.1']
    #allocation5 [shape = 'u8[655360]{0}', space=vmem, size = 0xa0000, scoped, tag = 'input window, operand 1']
    #allocation6 [shape = 's32[2]{0}', space=sflag, size = 0x8, scoped, tag = 'scoped memory for tpu_custom_call.1']
    #allocation7 [shape = 'u8[5120]{0}', space=vmem, size = 0x1400, scoped, tag = 'input window, operand 2']
    #allocation8 [shape = 'u8[40960]{0}', space=vmem, size = 0xa000, scoped, tag = 'output window, operand 0']
    %8 = vsyncpa [#allocation3], 0
    %9 = vsyncpa [#allocation6], 0
    %s10 = scalar_lea.sflag [#allocation6], 1
    %11 = vsyncpa %s10, 0
    %12 = vsyncpa [#allocation4], 0
    %s13 = scalar_lea.sflag [#allocation4], 1
    %14 = vsyncpa %s13, 0
    loop: start=0, step=1, limit=5
    $region2: #{tpu_custom_call.1} parent=1 // loop_pre_header
      _
    $region3: #{tpu_custom_call.1} parent=1 // loop_header
      %s16 = sphi 0, %s20
      %p17 = scmp.ge.s32.totalorder %s16, 5
      %s24 = sphi 0, %s24
      %s26 = sphi 0, %s24
      %s27 = sphi 0, %s26
      %s41 = sphi 0, %s27
      %s47 = sphi 0, %s49
      %s50 = sphi 0, %s47
      %s51 = sphi 0, %s50
      %s67 = sphi 0, %s51
      %s73 = sphi 0, %s75
      %s76 = sphi 0, %s73
      %s77 = sphi 0, %s76
      %s93 = sphi 0, %s77
      %s99 = sphi 0, %s101
      %s102 = sphi 0, %s99
      %s103 = sphi 0, %s102
      %s119 = sphi 0, %s103
    $region4: #{tpu_custom_call.1} parent=1 // loop_header_branch
      %19 = sbr.rel (%p17) target = $region8
    $region5: #{tpu_custom_call.1} parent=1 // loop_body
      %s21 = ssub.s32 %s16, 1
      %s22 = ssub.s32 %s16, 2
      %s23 = sadd.s32 %s16, 1
      %s25 = sadd.s32 %s24, 1
      %p28 = scmp.eq.s32.totalorder %s16, 2
      %p29 = scmp.ne.s32.totalorder %s24, %s26
      %p30 = scmp.eq.s32.totalorder %s16, 0
      %p31 = por %p29, %p30
      %p32 = scmp.ne.s32.totalorder %s24, %s26
      %p33 = scmp.eq.s32.totalorder %s21, 2
      %p34 = por %p32, %p33
      %p35 = scmp.ne.s32.totalorder %s26, %s27
      %p36 = scmp.eq.s32.totalorder %s21, 0
      %p37 = por %p35, %p36
      %p38 = scmp.ne.s32.totalorder %s26, %s27
      %p39 = scmp.eq.s32.totalorder %s22, 2
      %p40 = por %p38, %p39
      %p42 = scmp.ne.s32.totalorder %s27, %s41
      %p43 = scmp.eq.s32.totalorder %s22, 0
      %p44 = por %p42, %p43
      %s45 = ssub.s32 %s16, %s23
      %p46 = scmp.eq.s32.totalorder %s45, 0
      %s48 = sadd.s32 %s47, 1
      %s49 = scalar_select %p46, %s47, %s48
      %p52 = pneg %p46
      %p53 = scmp.eq.s32.totalorder %s16, 2
      %p54 = por %p52, %p53
      %p55 = scmp.ne.s32.totalorder %s47, %s50
      %p56 = scmp.eq.s32.totalorder %s16, 0
      %p57 = por %p55, %p56
      %p58 = scmp.ne.s32.totalorder %s47, %s50
      %p59 = scmp.eq.s32.totalorder %s21, 2
      %p60 = por %p58, %p59
      %p61 = scmp.ne.s32.totalorder %s50, %s51
      %p62 = scmp.eq.s32.totalorder %s21, 0
      %p63 = por %p61, %p62
      %p64 = scmp.ne.s32.totalorder %s50, %s51
      %p65 = scmp.eq.s32.totalorder %s22, 2
      %p66 = por %p64, %p65
      %p68 = scmp.ne.s32.totalorder %s51, %s67
      %p69 = scmp.eq.s32.totalorder %s22, 0
      %p70 = por %p68, %p69
      %s71 = ssub.s32 %s16, %s23
      %p72 = scmp.eq.s32.totalorder %s71, 0
      %s74 = sadd.s32 %s73, 1
      %s75 = scalar_select %p72, %s73, %s74
      %p78 = pneg %p72
      %p79 = scmp.eq.s32.totalorder %s16, 2
      %p80 = por %p78, %p79
      %p81 = scmp.ne.s32.totalorder %s73, %s76
      %p82 = scmp.eq.s32.totalorder %s16, 0
      %p83 = por %p81, %p82
      %p84 = scmp.ne.s32.totalorder %s73, %s76
      %p85 = scmp.eq.s32.totalorder %s21, 2
      %p86 = por %p84, %p85
      %p87 = scmp.ne.s32.totalorder %s76, %s77
      %p88 = scmp.eq.s32.totalorder %s21, 0
      %p89 = por %p87, %p88
      %p90 = scmp.ne.s32.totalorder %s76, %s77
      %p91 = scmp.eq.s32.totalorder %s22, 2
      %p92 = por %p90, %p91
      %p94 = scmp.ne.s32.totalorder %s77, %s93
      %p95 = scmp.eq.s32.totalorder %s22, 0
      %p96 = por %p94, %p95
      %s97 = ssub.s32 %s16, %s23
      %p98 = scmp.eq.s32.totalorder %s97, 0
      %s100 = sadd.s32 %s99, 1
      %s101 = scalar_select %p98, %s99, %s100
      %p104 = pneg %p98
      %p105 = scmp.eq.s32.totalorder %s16, 2
      %p106 = por %p104, %p105
      %p107 = scmp.ne.s32.totalorder %s99, %s102
      %p108 = scmp.eq.s32.totalorder %s16, 0
      %p109 = por %p107, %p108
      %p110 = scmp.ne.s32.totalorder %s99, %s102
      %p111 = scmp.eq.s32.totalorder %s21, 2
      %p112 = por %p110, %p111
      %p113 = scmp.ne.s32.totalorder %s102, %s103
      %p114 = scmp.eq.s32.totalorder %s21, 0
      %p115 = por %p113, %p114
      %p116 = scmp.ne.s32.totalorder %s102, %s103
      %p117 = scmp.eq.s32.totalorder %s22, 2
      %p118 = por %p116, %p117
      %p120 = scmp.ne.s32.totalorder %s103, %s119
      %p121 = scmp.eq.s32.totalorder %s22, 0
      %p122 = por %p120, %p121
      %p123 = scmp.le.s32.totalorder 1, %s16
      %p124 = scmp.lt.s32.totalorder %s16, 4
      %p125 = pnand %p123, %p124
      %p126 = pneg %p125
      // Predicated region
      $region9: #{tpu_custom_call.1} parent=5 // pred_check
        _
      $region10: #{tpu_custom_call.1} parent=5 // pred_check_branch
        %128 = sbr.rel (%p125) target = $region12
      $region11: #{tpu_custom_call.1} parent=5 // pred_region
        %s129 = ssub.s32 %s16, 1
        // Predicated region
        $region13: #{tpu_custom_call.1} parent=11 // pred_check
          %p130 = pneg %p37
        $region14: #{tpu_custom_call.1} parent=11 // pred_check_branch
          %132 = sbr.rel (%p130) target = $region16
        $region15: #{tpu_custom_call.1} parent=11 // pred_region
          %134 = vsyncadd [#allocation3], 0
          %s136 = sshll.u32 %s0, 4
          %s137 = int_to_ptr.hbm [resolvable:$true] %s136
          %s138 = sshll.u32 [#allocation2], 4
          %s139 = int_to_ptr.vmem [resolvable:$true] %s138
          %141 = dma.hbm_to_vmem [thread:$0]  %s137, 128, %s139, [#allocation3]
        $region16: #{tpu_custom_call.1} parent=11 // pred_fallthru
          _
      $region12: #{tpu_custom_call.1} parent=5 // pred_fallthru
        _
      %p142 = scmp.lt.s32.totalorder %s16, 3
      // Predicated region
      $region17: #{tpu_custom_call.1} parent=5 // pred_check
        %p143 = pneg %p142
      $region18: #{tpu_custom_call.1} parent=5 // pred_check_branch
        %145 = sbr.rel (%p143) target = $region20
      $region19: #{tpu_custom_call.1} parent=5 // pred_region
        // Predicated region
        $region21: #{tpu_custom_call.1} parent=19 // pred_check
          %p146 = pneg %p57
        $region22: #{tpu_custom_call.1} parent=19 // pred_check_branch
          %148 = sbr.rel (%p146) target = $region24
        $region23: #{tpu_custom_call.1} parent=19 // pred_region
          %s149 = sand.u32 %s16, 1
          %s150 = scalar_lea.sflag [#allocation6], %s149
          %s151 = sand.u32 %s47, 1
          %s152 = smul.addr %s151, 640
          %s153 = scalar_lea.vmem [#allocation5], %s152
          %s154 = smul.u32 5, %s16
          %156 = vsyncadd %s150, 0
          %s157 = smul.addr %s154, 8
          %s158 = scalar_lea.hbm %s1, %s157
          %s159 = sshll.u32 %s158, 4
          %s160 = int_to_ptr.hbm [resolvable:$true] %s159
          %s161 = sshll.u32 %s153, 4
          %s162 = int_to_ptr.vmem [resolvable:$true] %s161
          %167 = dma.hbm_to_vmem [thread:$0]  %s160, 10240, %s162, %s150, 1920, 640, 40
        $region24: #{tpu_custom_call.1} parent=19 // pred_fallthru
          _
        // Predicated region
        $region25: #{tpu_custom_call.1} parent=19 // pred_check
          %p168 = pneg %p83
        $region26: #{tpu_custom_call.1} parent=19 // pred_check_branch
          %170 = sbr.rel (%p168) target = $region28
        $region27: #{tpu_custom_call.1} parent=19 // pred_region
          %s171 = sand.u32 %s16, 1
          %s172 = scalar_lea.sflag [#allocation6], %s171
          %s173 = sand.u32 %s73, 1
          %s174 = smul.addr %s173, 5
          %s175 = scalar_lea.vmem [#allocation7], %s174
          %s176 = smul.u32 5, %s16
          %178 = vsyncadd %s172, 0
          %s179 = scalar_lea.hbm %s2, %s176
          %s181 = sshll.u32 %s179, 4
          %s182 = int_to_ptr.hbm [resolvable:$true] %s181
          %s183 = sshll.u32 %s175, 4
          %s184 = int_to_ptr.vmem [resolvable:$true] %s183
          %186 = dma.hbm_to_vmem [thread:$0]  %s182, 80, %s184, %s172
        $region28: #{tpu_custom_call.1} parent=19 // pred_fallthru
          _
      $region20: #{tpu_custom_call.1} parent=5 // pred_fallthru
        _
      %p187 = scmp.le.s32.totalorder 1, %s16
      %p188 = scmp.lt.s32.totalorder %s16, 4
      %p189 = pnand %p187, %p188
      %p190 = pneg %p189
      // Predicated region
      $region29: #{tpu_custom_call.1} parent=5 // pred_check
        _
      $region30: #{tpu_custom_call.1} parent=5 // pred_check_branch
        %192 = sbr.rel (%p189) target = $region32
      $region31: #{tpu_custom_call.1} parent=5 // pred_region
        %s193 = ssub.s32 %s16, 1
        // Predicated region
        $region33: #{tpu_custom_call.1} parent=31 // pred_check
          %p194 = pneg %p37
        $region34: #{tpu_custom_call.1} parent=31 // pred_check_branch
          %196 = sbr.rel (%p194) target = $region36
        $region35: #{tpu_custom_call.1} parent=31 // pred_region
          %198 = dma.done [#allocation3], 128
        $region36: #{tpu_custom_call.1} parent=31 // pred_fallthru
          _
        %s199 = sand.u32 %s21, 1
        %s200 = scalar_lea.sflag [#allocation6], %s199
        %s201 = sand.u32 %s50, 1
        %s202 = smul.addr %s201, 640
        %s203 = scalar_lea.vmem [#allocation5], %s202
        // Predicated region
        $region37: #{tpu_custom_call.1} parent=31 // pred_check
          %p204 = pneg %p63
        $region38: #{tpu_custom_call.1} parent=31 // pred_check_branch
          %206 = sbr.rel (%p204) target = $region40
        $region39: #{tpu_custom_call.1} parent=31 // pred_region
          %208 = dma.done %s200, 10240
        $region40: #{tpu_custom_call.1} parent=31 // pred_fallthru
          _
        %s209 = sand.u32 %s21, 1
        %s210 = scalar_lea.sflag [#allocation6], %s209
        %s211 = sand.u32 %s76, 1
        %s212 = smul.addr %s211, 5
        %s213 = scalar_lea.vmem [#allocation7], %s212
        // Predicated region
        $region41: #{tpu_custom_call.1} parent=31 // pred_check
          %p214 = pneg %p89
        $region42: #{tpu_custom_call.1} parent=31 // pred_check_branch
          %216 = sbr.rel (%p214) target = $region44
        $region43: #{tpu_custom_call.1} parent=31 // pred_region
          %218 = dma.done %s210, 80
        $region44: #{tpu_custom_call.1} parent=31 // pred_fallthru
          _
        %p219 = pneg %p37
        %p220 = pneg %p34
        %s221 = sand.u32 %s21, 1
        %s222 = scalar_lea.sflag [#allocation6], %s221
        %s223 = sand.u32 %s50, 1
        %s224 = smul.addr %s223, 640
        %s225 = scalar_lea.vmem [#allocation5], %s224
        %p226 = pneg %p63
        %p227 = pneg %p60
        %s228 = sand.u32 %s21, 1
        %s229 = scalar_lea.sflag [#allocation6], %s228
        %s230 = sand.u32 %s76, 1
        %s231 = smul.addr %s230, 5
        %s232 = scalar_lea.vmem [#allocation7], %s231
        %p233 = pneg %p89
        %p234 = pneg %p86
        %p235 = pneg %p115
        %p236 = pneg %p112
        %s237 = sand.u32 %s102, 1
        %s238 = scalar_lea.sflag [#allocation4], %s237
        %s239 = sand.u32 %s102, 1
        %s240 = smul.addr %s239, 40
        %s241 = scalar_lea.vmem [#allocation8], %s240
        %s242 = smul.u32 5, %s21
        %s243 = smul.u32 5, %s21
        %s244 = smul.u32 5, %s21
        %v245 = vld [vmem:[#allocation2] sm:$0xff]
        %v246 = vld [vmem:[%s203] sm:$0xff]
        %v247 = vld [vmem:[%s203 + $0x8] sm:$0xff]
        %v248 = vld [vmem:[%s203 + $0x10] sm:$0xff]
        %v249 = vld [vmem:[%s203 + $0x18] sm:$0xff]
        %v250 = vld [vmem:[%s203 + $0x20] sm:$0xff]
        %v251 = vld [vmem:[%s203 + $0x28] sm:$0xff]
        %v252 = vld [vmem:[%s203 + $0x30] sm:$0xff]
        %v253 = vld [vmem:[%s203 + $0x38] sm:$0xff]
        %v254 = vld [vmem:[%s203 + $0x40] sm:$0xff]
        %v255 = vld [vmem:[%s203 + $0x48] sm:$0xff]
        %v256 = vld [vmem:[%s203 + $0x50] sm:$0xff]
        %v257 = vld [vmem:[%s203 + $0x58] sm:$0xff]
        %v258 = vld [vmem:[%s203 + $0x60] sm:$0xff]
        %v259 = vld [vmem:[%s203 + $0x68] sm:$0xff]
        %v260 = vld [vmem:[%s203 + $0x70] sm:$0xff]
        %v261 = vld [vmem:[%s203 + $0x78] sm:$0xff]
        %v262 = vld [vmem:[%s203 + $0x80] sm:$0xff]
        %v263 = vld [vmem:[%s203 + $0x88] sm:$0xff]
        %v264 = vld [vmem:[%s203 + $0x90] sm:$0xff]
        %v265 = vld [vmem:[%s203 + $0x98] sm:$0xff]
        %v266 = vld [vmem:[%s203 + $0xa0] sm:$0xff]
        %v267 = vld [vmem:[%s203 + $0xa8] sm:$0xff]
        %v268 = vld [vmem:[%s203 + $0xb0] sm:$0xff]
        %v269 = vld [vmem:[%s203 + $0xb8] sm:$0xff]
        %v270 = vld [vmem:[%s203 + $0xc0] sm:$0xff]
        %v271 = vld [vmem:[%s203 + $0xc8] sm:$0xff]
        %v272 = vld [vmem:[%s203 + $0xd0] sm:$0xff]
        %v273 = vld [vmem:[%s203 + $0xd8] sm:$0xff]
        %v274 = vld [vmem:[%s203 + $0xe0] sm:$0xff]
        %v275 = vld [vmem:[%s203 + $0xe8] sm:$0xff]
        %v276 = vld [vmem:[%s203 + $0xf0] sm:$0xff]
        %v277 = vld [vmem:[%s203 + $0xf8] sm:$0xff]
        %v278 = vld [vmem:[%s203 + $0x100] sm:$0xff]
        %v279 = vld [vmem:[%s203 + $0x108] sm:$0xff]
        %v280 = vld [vmem:[%s203 + $0x110] sm:$0xff]
        %v281 = vld [vmem:[%s203 + $0x118] sm:$0xff]
        %v282 = vld [vmem:[%s203 + $0x120] sm:$0xff]
        %v283 = vld [vmem:[%s203 + $0x128] sm:$0xff]
        %v284 = vld [vmem:[%s203 + $0x130] sm:$0xff]
        %v285 = vld [vmem:[%s203 + $0x138] sm:$0xff]
        %v286 = vld [vmem:[%s203 + $0x140] sm:$0xff]
        %v287 = vld [vmem:[%s203 + $0x148] sm:$0xff]
        %v288 = vld [vmem:[%s203 + $0x150] sm:$0xff]
        %v289 = vld [vmem:[%s203 + $0x158] sm:$0xff]
        %v290 = vld [vmem:[%s203 + $0x160] sm:$0xff]
        %v291 = vld [vmem:[%s203 + $0x168] sm:$0xff]
        %v292 = vld [vmem:[%s203 + $0x170] sm:$0xff]
        %v293 = vld [vmem:[%s203 + $0x178] sm:$0xff]
        %v294 = vld [vmem:[%s203 + $0x180] sm:$0xff]
        %v295 = vld [vmem:[%s203 + $0x188] sm:$0xff]
        %v296 = vld [vmem:[%s203 + $0x190] sm:$0xff]
        %v297 = vld [vmem:[%s203 + $0x198] sm:$0xff]
        %v298 = vld [vmem:[%s203 + $0x1a0] sm:$0xff]
        %v299 = vld [vmem:[%s203 + $0x1a8] sm:$0xff]
        %v300 = vld [vmem:[%s203 + $0x1b0] sm:$0xff]
        %v301 = vld [vmem:[%s203 + $0x1b8] sm:$0xff]
        %v302 = vld [vmem:[%s203 + $0x1c0] sm:$0xff]
        %v303 = vld [vmem:[%s203 + $0x1c8] sm:$0xff]
        %v304 = vld [vmem:[%s203 + $0x1d0] sm:$0xff]
        %v305 = vld [vmem:[%s203 + $0x1d8] sm:$0xff]
        %v306 = vld [vmem:[%s203 + $0x1e0] sm:$0xff]
        %v307 = vld [vmem:[%s203 + $0x1e8] sm:$0xff]
        %v308 = vld [vmem:[%s203 + $0x1f0] sm:$0xff]
        %v309 = vld [vmem:[%s203 + $0x1f8] sm:$0xff]
        %v310 = vld [vmem:[%s203 + $0x200] sm:$0xff]
        %v311 = vld [vmem:[%s203 + $0x208] sm:$0xff]
        %v312 = vld [vmem:[%s203 + $0x210] sm:$0xff]
        %v313 = vld [vmem:[%s203 + $0x218] sm:$0xff]
        %v314 = vld [vmem:[%s203 + $0x220] sm:$0xff]
        %v315 = vld [vmem:[%s203 + $0x228] sm:$0xff]
        %v316 = vld [vmem:[%s203 + $0x230] sm:$0xff]
        %v317 = vld [vmem:[%s203 + $0x238] sm:$0xff]
        %v318 = vld [vmem:[%s203 + $0x240] sm:$0xff]
        %v319 = vld [vmem:[%s203 + $0x248] sm:$0xff]
        %v320 = vld [vmem:[%s203 + $0x250] sm:$0xff]
        %v321 = vld [vmem:[%s203 + $0x258] sm:$0xff]
        %v322 = vld [vmem:[%s203 + $0x260] sm:$0xff]
        %v323 = vld [vmem:[%s203 + $0x268] sm:$0xff]
        %v324 = vld [vmem:[%s203 + $0x270] sm:$0xff]
        %v325 = vld [vmem:[%s203 + $0x278] sm:$0xff]
        %v326 = vld [vmem:[%s213] sm:$0x1f]
        %v328 = vperm.slane %v326, 0
        %v329 = vperm.slane %v326, 1
        %v330 = vperm.slane %v326, 2
        %v331 = vperm.slane %v326, 3
        %v332 = vperm.slane %v326, 4
        %338 = vmatpush.msra.mxu0 %v321
        %339 = vmatpush.msra.mxu0 %v316
        %340 = vmatpush.msra.mxu0 %v311
        %341 = vmatpush.msra.mxu0 %v306
        %342 = vmatpush.msra.mxu0 %v301
        %343 = vmatpush.msra.mxu0 %v296
        %344 = vmatpush.msra.mxu0 %v291
        %345 = vmatpush.msra.mxu0 %v286
        %346 = vmatpush.msra.mxu0 %v281
        %347 = vmatpush.msra.mxu0 %v276
        %348 = vmatpush.msra.mxu0 %v271
        %349 = vmatpush.msra.mxu0 %v266
        %350 = vmatpush.msra.mxu0 %v261
        %351 = vmatpush.msra.mxu0 %v256
        %352 = vmatpush.msra.mxu0 %v251
        %353 = vmatpush.msra.mxu0 %v246
        %354 = vmatmul.f32.gmra.mxu0 %v245
        %v355 = vpop.f32.mrf.mxu0
        %v356 = vadd.f32 %v328, %v355
        %357 = vdwg.mxu0
        %358 = vmatpush.msra.mxu0 %v322
        %359 = vmatpush.msra.mxu0 %v317
        %360 = vmatpush.msra.mxu0 %v312
        %361 = vmatpush.msra.mxu0 %v307
        %362 = vmatpush.msra.mxu0 %v302
        %363 = vmatpush.msra.mxu0 %v297
        %364 = vmatpush.msra.mxu0 %v292
        %365 = vmatpush.msra.mxu0 %v287
        %366 = vmatpush.msra.mxu0 %v282
        %367 = vmatpush.msra.mxu0 %v277
        %368 = vmatpush.msra.mxu0 %v272
        %369 = vmatpush.msra.mxu0 %v267
        %370 = vmatpush.msra.mxu0 %v262
        %371 = vmatpush.msra.mxu0 %v257
        %372 = vmatpush.msra.mxu0 %v252
        %373 = vmatpush.msra.mxu0 %v247
        %374 = vmatmul.f32.gmra.mxu0 %v245
        %v375 = vpop.f32.mrf.mxu0
        %v376 = vadd.f32 %v329, %v375
        %377 = vdwg.mxu0
        %378 = vmatpush.msra.mxu0 %v323
        %379 = vmatpush.msra.mxu0 %v318
        %380 = vmatpush.msra.mxu0 %v313
        %381 = vmatpush.msra.mxu0 %v308
        %382 = vmatpush.msra.mxu0 %v303
        %383 = vmatpush.msra.mxu0 %v298
        %384 = vmatpush.msra.mxu0 %v293
        %385 = vmatpush.msra.mxu0 %v288
        %386 = vmatpush.msra.mxu0 %v283
        %387 = vmatpush.msra.mxu0 %v278
        %388 = vmatpush.msra.mxu0 %v273
        %389 = vmatpush.msra.mxu0 %v268
        %390 = vmatpush.msra.mxu0 %v263
        %391 = vmatpush.msra.mxu0 %v258
        %392 = vmatpush.msra.mxu0 %v253
        %393 = vmatpush.msra.mxu0 %v248
        %394 = vmatmul.f32.gmra.mxu0 %v245
        %v395 = vpop.f32.mrf.mxu0
        %v396 = vadd.f32 %v330, %v395
        %397 = vdwg.mxu0
        %398 = vmatpush.msra.mxu0 %v324
        %399 = vmatpush.msra.mxu0 %v319
        %400 = vmatpush.msra.mxu0 %v314
        %401 = vmatpush.msra.mxu0 %v309
        %402 = vmatpush.msra.mxu0 %v304
        %403 = vmatpush.msra.mxu0 %v299
        %404 = vmatpush.msra.mxu0 %v294
        %405 = vmatpush.msra.mxu0 %v289
        %406 = vmatpush.msra.mxu0 %v284
        %407 = vmatpush.msra.mxu0 %v279
        %408 = vmatpush.msra.mxu0 %v274
        %409 = vmatpush.msra.mxu0 %v269
        %410 = vmatpush.msra.mxu0 %v264
        %411 = vmatpush.msra.mxu0 %v259
        %412 = vmatpush.msra.mxu0 %v254
        %413 = vmatpush.msra.mxu0 %v249
        %414 = vmatmul.f32.gmra.mxu0 %v245
        %v415 = vpop.f32.mrf.mxu0
        %v416 = vadd.f32 %v331, %v415
        %417 = vdwg.mxu0
        %418 = vmatpush.msra.mxu0 %v325
        %419 = vmatpush.msra.mxu0 %v320
        %420 = vmatpush.msra.mxu0 %v315
        %421 = vmatpush.msra.mxu0 %v310
        %422 = vmatpush.msra.mxu0 %v305
        %423 = vmatpush.msra.mxu0 %v300
        %424 = vmatpush.msra.mxu0 %v295
        %425 = vmatpush.msra.mxu0 %v290
        %426 = vmatpush.msra.mxu0 %v285
        %427 = vmatpush.msra.mxu0 %v280
        %428 = vmatpush.msra.mxu0 %v275
        %429 = vmatpush.msra.mxu0 %v270
        %430 = vmatpush.msra.mxu0 %v265
        %431 = vmatpush.msra.mxu0 %v260
        %432 = vmatpush.msra.mxu0 %v255
        %433 = vmatpush.msra.mxu0 %v250
        %434 = vmatmul.f32.gmra.mxu0 %v245
        %v435 = vpop.f32.mrf.mxu0
        %v436 = vadd.f32 %v332, %v435
        %437 = vdwg.mxu0
        %v438 = vmul.f32 %v356, 0.5
        %v439 = vmul.f32 %v376, 0.5
        %v440 = vmul.f32 %v396, 0.5
        %v441 = vmul.f32 %v416, 0.5
        %v442 = vmul.f32 %v436, 0.5
        %v443 = vmul.f32 %v356, 0.70710677
        %v444 = vmul.f32 %v376, 0.70710677
        %v445 = vmul.f32 %v396, 0.70710677
        %v446 = vmul.f32 %v416, 0.70710677
        %v447 = vmul.f32 %v436, 0.70710677
        %v448 = vmul.f32 %v443, %v443
        %v449 = vmin.f32 16.0, %v448
        %v450 = vmul.f32 %v449, 2.1237322e-06
        %v451 = vadd.f32 %v450, 0.00028619796
        %v452 = vmul.f32 %v449, %v451
        %v453 = vadd.f32 %v452, 0.0036580483
        %v454 = vmul.f32 %v449, %v453
        %v455 = vadd.f32 %v454, 0.05243302
        %v456 = vmul.f32 %v449, %v455
        %v457 = vadd.f32 %v456, 0.18741608
        %v458 = vmul.f32 %v449, %v457
        %v459 = vadd.f32 %v458, 1.1283791
        %v460 = vmul.f32 %v443, %v459
        %v461 = vmul.f32 %v449, 3.8918573e-05
        %v462 = vadd.f32 %v461, 0.001143296
        %v463 = vmul.f32 %v449, %v462
        %v464 = vadd.f32 %v463, 0.014752088
        %v465 = vmul.f32 %v449, %v464
        %v466 = vadd.f32 %v465, 0.112945676
        %v467 = vmul.f32 %v449, %v466
        %v468 = vadd.f32 %v467, 0.4994258
        %v469 = vmul.f32 %v449, %v468
        %v470 = vadd.f32 %v469, 1.0
        %v471 = vrcp.pop %v470
        %v472 = vmul.f32 %v470, %v471
        %v473 = vsub.f32 1.0, %v472
        %v474 = vmul.f32 %v471, %v473
        %v475 = vadd.f32 %v471, %v474
        %vm476 = vweird.f32 %v470
        %vm477 = vweird.f32 %v471
        %vm478 = vmor %vm476, %vm477
        %v479 = vsel %vm478, %v471, %v475
        %v480 = vand.u32 2147483647, %v470
        %vm481 = vcmp.eq.f32.partialorder %v480, 8.507059e+37
        %v482 = vand.u32 %v470, 2147483648
        %v483 = vor.u32 1.1754944e-38, %v482
        %v484 = vsel %vm481, %v483, %v479
        %v485 = vmul.f32 %v460, %v484
        %v486 = vmin.f32 %v485, 1.0
        %v487 = vmax.f32 %v486, -1.0
        %v488 = vmul.f32 %v444, %v444
        %v489 = vmin.f32 16.0, %v488
        %v490 = vmul.f32 %v489, 2.1237322e-06
        %v491 = vadd.f32 %v490, 0.00028619796
        %v492 = vmul.f32 %v489, %v491
        %v493 = vadd.f32 %v492, 0.0036580483
        %v494 = vmul.f32 %v489, %v493
        %v495 = vadd.f32 %v494, 0.05243302
        %v496 = vmul.f32 %v489, %v495
        %v497 = vadd.f32 %v496, 0.18741608
        %v498 = vmul.f32 %v489, %v497
        %v499 = vadd.f32 %v498, 1.1283791
        %v500 = vmul.f32 %v444, %v499
        %v501 = vmul.f32 %v489, 3.8918573e-05
        %v502 = vadd.f32 %v501, 0.001143296
        %v503 = vmul.f32 %v489, %v502
        %v504 = vadd.f32 %v503, 0.014752088
        %v505 = vmul.f32 %v489, %v504
        %v506 = vadd.f32 %v505, 0.112945676
        %v507 = vmul.f32 %v489, %v506
        %v508 = vadd.f32 %v507, 0.4994258
        %v509 = vmul.f32 %v489, %v508
        %v510 = vadd.f32 %v509, 1.0
        %v511 = vrcp.pop %v510
        %v512 = vmul.f32 %v510, %v511
        %v513 = vsub.f32 1.0, %v512
        %v514 = vmul.f32 %v511, %v513
        %v515 = vadd.f32 %v511, %v514
        %vm516 = vweird.f32 %v510
        %vm517 = vweird.f32 %v511
        %vm518 = vmor %vm516, %vm517
        %v519 = vsel %vm518, %v511, %v515
        %v520 = vand.u32 2147483647, %v510
        %vm521 = vcmp.eq.f32.partialorder %v520, 8.507059e+37
        %v522 = vand.u32 %v510, 2147483648
        %v523 = vor.u32 1.1754944e-38, %v522
        %v524 = vsel %vm521, %v523, %v519
        %v525 = vmul.f32 %v500, %v524
        %v526 = vmin.f32 %v525, 1.0
        %v527 = vmax.f32 %v526, -1.0
        %v528 = vmul.f32 %v445, %v445
        %v529 = vmin.f32 16.0, %v528
        %v530 = vmul.f32 %v529, 2.1237322e-06
        %v531 = vadd.f32 %v530, 0.00028619796
        %v532 = vmul.f32 %v529, %v531
        %v533 = vadd.f32 %v532, 0.0036580483
        %v534 = vmul.f32 %v529, %v533
        %v535 = vadd.f32 %v534, 0.05243302
        %v536 = vmul.f32 %v529, %v535
        %v537 = vadd.f32 %v536, 0.18741608
        %v538 = vmul.f32 %v529, %v537
        %v539 = vadd.f32 %v538, 1.1283791
        %v540 = vmul.f32 %v445, %v539
        %v541 = vmul.f32 %v529, 3.8918573e-05
        %v542 = vadd.f32 %v541, 0.001143296
        %v543 = vmul.f32 %v529, %v542
        %v544 = vadd.f32 %v543, 0.014752088
        %v545 = vmul.f32 %v529, %v544
        %v546 = vadd.f32 %v545, 0.112945676
        %v547 = vmul.f32 %v529, %v546
        %v548 = vadd.f32 %v547, 0.4994258
        %v549 = vmul.f32 %v529, %v548
        %v550 = vadd.f32 %v549, 1.0
        %v551 = vrcp.pop %v550
        %v552 = vmul.f32 %v550, %v551
        %v553 = vsub.f32 1.0, %v552
        %v554 = vmul.f32 %v551, %v553
        %v555 = vadd.f32 %v551, %v554
        %vm556 = vweird.f32 %v550
        %vm557 = vweird.f32 %v551
        %vm558 = vmor %vm556, %vm557
        %v559 = vsel %vm558, %v551, %v555
        %v560 = vand.u32 2147483647, %v550
        %vm561 = vcmp.eq.f32.partialorder %v560, 8.507059e+37
        %v562 = vand.u32 %v550, 2147483648
        %v563 = vor.u32 1.1754944e-38, %v562
        %v564 = vsel %vm561, %v563, %v559
        %v565 = vmul.f32 %v540, %v564
        %v566 = vmin.f32 %v565, 1.0
        %v567 = vmax.f32 %v566, -1.0
        %v568 = vmul.f32 %v446, %v446
        %v569 = vmin.f32 16.0, %v568
        %v570 = vmul.f32 %v569, 2.1237322e-06
        %v571 = vadd.f32 %v570, 0.00028619796
        %v572 = vmul.f32 %v569, %v571
        %v573 = vadd.f32 %v572, 0.0036580483
        %v574 = vmul.f32 %v569, %v573
        %v575 = vadd.f32 %v574, 0.05243302
        %v576 = vmul.f32 %v569, %v575
        %v577 = vadd.f32 %v576, 0.18741608
        %v578 = vmul.f32 %v569, %v577
        %v579 = vadd.f32 %v578, 1.1283791
        %v580 = vmul.f32 %v446, %v579
        %v581 = vmul.f32 %v569, 3.8918573e-05
        %v582 = vadd.f32 %v581, 0.001143296
        %v583 = vmul.f32 %v569, %v582
        %v584 = vadd.f32 %v583, 0.014752088
        %v585 = vmul.f32 %v569, %v584
        %v586 = vadd.f32 %v585, 0.112945676
        %v587 = vmul.f32 %v569, %v586
        %v588 = vadd.f32 %v587, 0.4994258
        %v589 = vmul.f32 %v569, %v588
        %v590 = vadd.f32 %v589, 1.0
        %v591 = vrcp.pop %v590
        %v592 = vmul.f32 %v590, %v591
        %v593 = vsub.f32 1.0, %v592
        %v594 = vmul.f32 %v591, %v593
        %v595 = vadd.f32 %v591, %v594
        %vm596 = vweird.f32 %v590
        %vm597 = vweird.f32 %v591
        %vm598 = vmor %vm596, %vm597
        %v599 = vsel %vm598, %v591, %v595
        %v600 = vand.u32 2147483647, %v590
        %vm601 = vcmp.eq.f32.partialorder %v600, 8.507059e+37
        %v602 = vand.u32 %v590, 2147483648
        %v603 = vor.u32 1.1754944e-38, %v602
        %v604 = vsel %vm601, %v603, %v599
        %v605 = vmul.f32 %v580, %v604
        %v606 = vmin.f32 %v605, 1.0
        %v607 = vmax.f32 %v606, -1.0
        %v608 = vmul.f32 %v447, %v447
        %v609 = vmin.f32 16.0, %v608
        %v610 = vmul.f32 %v609, 2.1237322e-06
        %v611 = vadd.f32 %v610, 0.00028619796
        %v612 = vmul.f32 %v609, %v611
        %v613 = vadd.f32 %v612, 0.0036580483
        %v614 = vmul.f32 %v609, %v613
        %v615 = vadd.f32 %v614, 0.05243302
        %v616 = vmul.f32 %v609, %v615
        %v617 = vadd.f32 %v616, 0.18741608
        %v618 = vmul.f32 %v609, %v617
        %v619 = vadd.f32 %v618, 1.1283791
        %v620 = vmul.f32 %v447, %v619
        %v621 = vmul.f32 %v609, 3.8918573e-05
        %v622 = vadd.f32 %v621, 0.001143296
        %v623 = vmul.f32 %v609, %v622
        %v624 = vadd.f32 %v623, 0.014752088
        %v625 = vmul.f32 %v609, %v624
        %v626 = vadd.f32 %v625, 0.112945676
        %v627 = vmul.f32 %v609, %v626
        %v628 = vadd.f32 %v627, 0.4994258
        %v629 = vmul.f32 %v609, %v628
        %v630 = vadd.f32 %v629, 1.0
        %v631 = vrcp.pop %v630
        %v632 = vmul.f32 %v630, %v631
        %v633 = vsub.f32 1.0, %v632
        %v634 = vmul.f32 %v631, %v633
        %v635 = vadd.f32 %v631, %v634
        %vm636 = vweird.f32 %v630
        %vm637 = vweird.f32 %v631
        %vm638 = vmor %vm636, %vm637
        %v639 = vsel %vm638, %v631, %v635
        %v640 = vand.u32 2147483647, %v630
        %vm641 = vcmp.eq.f32.partialorder %v640, 8.507059e+37
        %v642 = vand.u32 %v630, 2147483648
        %v643 = vor.u32 1.1754944e-38, %v642
        %v644 = vsel %vm641, %v643, %v639
        %v645 = vmul.f32 %v620, %v644
        %v646 = vmin.f32 %v645, 1.0
        %v647 = vmax.f32 %v646, -1.0
        %v648 = vadd.f32 %v487, 1.0
        %v649 = vadd.f32 %v527, 1.0
        %v650 = vadd.f32 %v567, 1.0
        %v651 = vadd.f32 %v607, 1.0
        %v652 = vadd.f32 %v647, 1.0
        %v653 = vmul.f32 %v438, %v648
        %v654 = vmul.f32 %v439, %v649
        %v655 = vmul.f32 %v440, %v650
        %v656 = vmul.f32 %v441, %v651
        %v657 = vmul.f32 %v442, %v652
        %658 = vst [vmem:[%s241] sm:$0xff] %v653
        %659 = vst [vmem:[%s241 + $0x8] sm:$0xff] %v654
        %660 = vst [vmem:[%s241 + $0x10] sm:$0xff] %v655
        %661 = vst [vmem:[%s241 + $0x18] sm:$0xff] %v656
        %662 = vst [vmem:[%s241 + $0x20] sm:$0xff] %v657
        %s663 = sand.u32 %s102, 1
        %s664 = scalar_lea.sflag [#allocation4], %s663
        %s665 = sand.u32 %s102, 1
        %s666 = smul.addr %s665, 40
        %s667 = scalar_lea.vmem [#allocation8], %s666
        // Predicated region
        $region45: #{tpu_custom_call.1} parent=31 // pred_check
          %p668 = pneg %p112
        $region46: #{tpu_custom_call.1} parent=31 // pred_check_branch
          %670 = sbr.rel (%p668) target = $region48
        $region47: #{tpu_custom_call.1} parent=31 // pred_region
          %s671 = smul.u32 5, %s21
          %673 = vsyncadd %s664, 0
          %s674 = smul.addr %s671, 8
          %s675 = scalar_lea.hbm %s3, %s674
          %s677 = sshll.u32 %s667, 4
          %s678 = int_to_ptr.vmem [resolvable:$true] %s677
          %s679 = sshll.u32 %s675, 4
          %s680 = int_to_ptr.hbm [resolvable:$true] %s679
          %682 = dma.vmem_to_hbm [thread:$0]  %s678, 640, %s680, %s664
        $region48: #{tpu_custom_call.1} parent=31 // pred_fallthru
          _
      $region32: #{tpu_custom_call.1} parent=5 // pred_fallthru
        _
      %p683 = scmp.le.s32.totalorder 2, %s16
      // Predicated region
      $region49: #{tpu_custom_call.1} parent=5 // pred_check
        %p684 = pneg %p683
      $region50: #{tpu_custom_call.1} parent=5 // pred_check_branch
        %686 = sbr.rel (%p684) target = $region52
      $region51: #{tpu_custom_call.1} parent=5 // pred_region
        %s687 = ssub.s32 %s16, 2
        // Predicated region
        $region53: #{tpu_custom_call.1} parent=51 // pred_check
          %p688 = pneg %p118
        $region54: #{tpu_custom_call.1} parent=51 // pred_check_branch
          %690 = sbr.rel (%p688) target = $region56
        $region55: #{tpu_custom_call.1} parent=51 // pred_region
          %s691 = sand.u32 %s103, 1
          %s692 = scalar_lea.sflag [#allocation4], %s691
          %s693 = sand.u32 %s103, 1
          %s694 = smul.addr %s693, 40
          %s695 = scalar_lea.vmem [#allocation8], %s694
          %697 = dma.done %s692, 640
        $region56: #{tpu_custom_call.1} parent=51 // pred_fallthru
          _
      $region52: #{tpu_custom_call.1} parent=5 // pred_fallthru
        _
    $region6: #{tpu_custom_call.1} parent=1 // loop_footer
      %s20 = sadd.s32 1, %s16
    $region7: #{tpu_custom_call.1} parent=1 // loop_footer_branch
      %15 = sbr.rel target = $region3
    $region8: #{tpu_custom_call.1} parent=1 // loop_exit
      _
    %698 = vsyncpa [#allocation3], 1
    %s699 = scalar_lea.sflag [#allocation3], 1
    %700 = vsyncpa %s699, 1
    %701 = vsyncpa [#allocation6], 1
    %s702 = scalar_lea.sflag [#allocation6], 1
    %703 = vsyncpa %s702, 1
    %704 = vsyncpa [#allocation4], 1
    %s705 = scalar_lea.sflag [#allocation4], 1
    %706 = vsyncpa %s705, 1

</llo_original>
